<compile_context>
chip_gen: v7x
topology: tpu7x:2x2x1
jax: 0.10.0
libtpu: 0.0.40
codegen_flags: <defaults>
</compile_context>

<pallas_src>
import functools

import jax
import jax.numpy as jnp
from jax.experimental import pallas as pl
from jax.experimental.pallas import tpu as pltpu

EPS = 1e-6          # GeM clamp epsilon (matches the module)
TINY = 1e-30        # log() floor, only ever hit by zero-padded batch rows
TS_MAX = 8192       # max spatial tile (lanes) for the fused stem kernel


def _round_up(x, m):
    return ((x + m - 1) // m) * m


def _silu_gem_pow(z, p):
    """SiLU + clamp(EPS) + ^p with bf16 transcendentals (EUP bf16 path on v6e/v7x).

    Shared by the Pallas kernel and the pure-JAX reference so the numeric check
    compares like against like.  Returns f32 for the GeM accumulation.
    """
    zb = z.astype(jnp.bfloat16)
    feat = zb * jax.nn.sigmoid(zb)                         # SiLU
    feat = jnp.maximum(feat, jnp.bfloat16(EPS))            # clamp(min=eps)
    pw = jnp.exp(p.astype(jnp.bfloat16) * jnp.log(feat))   # x^p = exp(p*log(x))
    return pw.astype(jnp.float32)


# ----------------------------------------------------------------------------
# Kernel 1: fused conv-stem (3x3 / stride 2 / Cin=1) + SiLU + GeM ^p accumulation
# ----------------------------------------------------------------------------
def stem_gem_kernel(p_ref, patches_ref, wconv_ref, bconv_ref, out_ref, acc_ref,
                    *, s_total, ts):
    s = pl.program_id(1)
    last = pl.num_programs(1) - 1

    @pl.when(s == 0)
    def _init():
        acc_ref[...] = jnp.zeros_like(acc_ref)

    x = patches_ref[0]                                   # (9, TS) bf16 conv taps
    # conv stem as (C, 9) @ (9, TS) -> (C, TS): channels on sublanes, spatial lane-dense.
    z = jnp.dot(wconv_ref[...], x, preferred_element_type=jnp.float32)
    z = z + bconv_ref[...]                               # (C, 1) bias, lane broadcast
    zp = _silu_gem_pow(z, p_ref[0])                      # (C, TS) f32 GeM x^p

    @pl.when(s < last)
    def _accum_full():
        # interior tiles have no spatial zero-padding -> unmasked sum
        acc_ref[...] += jnp.sum(zp, axis=1, keepdims=True)

    @pl.when(s == last)
    def _accum_masked_and_store():
        # only the final tile can contain zero-padded spatial positions
        lane = jax.lax.broadcasted_iota(jnp.int32, zp.shape, 1)
        zpm = jnp.where(lane < (s_total - s * ts), zp, 0.0)
        acc_ref[...] += jnp.sum(zpm, axis=1, keepdims=True)
        out_ref[...] = acc_ref[...][None]                # (1, C, 1)


def stem_gem_pow_sum(patches, p, wconv, bconv, *, ts, s_total):
    B, _, S_pad = patches.shape
    C = wconv.shape[0]
    kernel = functools.partial(stem_gem_kernel, s_total=s_total, ts=ts)
    return pl.pallas_call(
        kernel,
        out_shape=jax.ShapeDtypeStruct((B, C, 1), jnp.float32),
        grid_spec=pltpu.PrefetchScalarGridSpec(
            num_scalar_prefetch=1,
            grid=(B, S_pad // ts),
            in_specs=[
                pl.BlockSpec((1, 9, ts), lambda b, s, p_ref: (b, 0, s)),
                pl.BlockSpec((C, 9), lambda b, s, p_ref: (0, 0)),   # resident weight
                pl.BlockSpec((C, 1), lambda b, s, p_ref: (0, 0)),   # resident bias
            ],
            out_specs=pl.BlockSpec((1, C, 1), lambda b, s, p_ref: (b, 0, 0)),
            scratch_shapes=[pltpu.VMEM((C, 1), jnp.float32)],
        ),
        compiler_params=pltpu.CompilerParams(
            dimension_semantics=("parallel", "arbitrary"),
            vmem_limit_bytes=32 * 1024 * 1024,
        ),
    )(p, patches, wconv, bconv)


# ----------------------------------------------------------------------------
# Kernel 2: GeM finalize (mean, ^(1/p)) + composed (embedding @ fc) Linear
# ----------------------------------------------------------------------------
def gem_head_kernel(p_ref, psum_ref, w_ref, b_ref, out_ref, *, s_total):
    p = p_ref[0]
    mean = psum_ref[...] * (1.0 / s_total)               # (TB, C) spatial mean of x^p
    mean = jnp.maximum(mean, TINY)                       # guard log(0) on padded rows
    pooled = jnp.exp(jnp.log(mean) * (1.0 / p))          # ^(1/p)
    out_ref[...] = jnp.dot(pooled, w_ref[...],
                           preferred_element_type=jnp.float32) + b_ref[...]


def gem_head(psum, p, w_comb, b_comb, *, s_total, tb):
    Bp, C = psum.shape
    Np = w_comb.shape[1]
    kernel = functools.partial(gem_head_kernel, s_total=s_total)
    return pl.pallas_call(
        kernel,
        out_shape=jax.ShapeDtypeStruct((Bp, Np), jnp.float32),
        grid_spec=pltpu.PrefetchScalarGridSpec(
            num_scalar_prefetch=1,
            grid=(Bp // tb,),
            in_specs=[
                pl.BlockSpec((tb, C), lambda i, p_ref: (i, 0)),
                pl.BlockSpec((C, Np), lambda i, p_ref: (0, 0)),     # resident weight
                pl.BlockSpec((1, Np), lambda i, p_ref: (0, 0)),     # resident bias
            ],
            out_specs=pl.BlockSpec((tb, Np), lambda i, p_ref: (i, 0)),
        ),
        compiler_params=pltpu.CompilerParams(
            dimension_semantics=("parallel",),
            vmem_limit_bytes=32 * 1024 * 1024,
        ),
    )(p, psum, w_comb, b_comb)


# ----------------------------------------------------------------------------
# Glue: tap-plane construction, parameter setup, full forward
# ----------------------------------------------------------------------------
def conv_taps(x, Ho, Wo):
    """9 stride-2 taps of the (pad=1) image, spatial flattened lane-dense: (B, 9, Ho*Wo)."""
    B = x.shape[0]
    xp = jnp.pad(x, ((0, 0), (1, 1), (1, 1)))
    taps = []
    for ki in range(3):
        for kj in range(3):
            taps.append(xp[:, ki:ki + 2 * Ho:2, kj:kj + 2 * Wo:2].reshape(B, Ho * Wo))
    return jnp.stack(taps, axis=1)                       # (B, 9, S)


def init_params(key, c_feat=32, embedding_size=64, num_classes=24, ksize=3):
    k = jax.random.split(key, 6)
    scale = 0.1
    return {
        # conv stem, PyTorch layout (Cout, Cin=1, kh, kw)
        "conv_w": scale * jax.random.normal(k[0], (c_feat, 1, ksize, ksize), jnp.float32),
        "conv_b": scale * jax.random.normal(k[1], (c_feat,), jnp.float32),
        # GeM exponent p (nn.Parameter, init 3.0)
        "gem_p": jnp.ones((1,), jnp.float32) * 3.0,
        # embedding Linear, PyTorch (out, in)
        "emb_w": scale * jax.random.normal(k[2], (embedding_size, c_feat), jnp.float32),
        "emb_b": scale * jax.random.normal(k[3], (embedding_size,), jnp.float32),
        # fc Linear, PyTorch (out, in)
        "fc_w": scale * jax.random.normal(k[4], (num_classes, embedding_size), jnp.float32),
        "fc_b": scale * jax.random.normal(k[5], (num_classes,), jnp.float32),
    }


@functools.partial(jax.jit, static_argnames=("ts_max",))
def birdclef_forward(images_nchw, params, *, ts_max=TS_MAX):
    hi = jax.lax.Precision.HIGHEST
    images = images_nchw.astype(jnp.float32)
    B, _, H, W = images.shape
    x = images[:, 0]                                     # in_channels = 1
    Ho = (H + 2 - 3) // 2 + 1
    Wo = (W + 2 - 3) // 2 + 1
    S = Ho * Wo

    # spatial tile: lane-dense (multiple of 128), as large as possible up to ts_max
    ts = min(ts_max, _round_up(S, 128))
    S_pad = _round_up(S, ts)

    # bf16 conv taps for the MXU read (f32 accumulation inside the kernel)
    patches = conv_taps(x, Ho, Wo).astype(jnp.bfloat16)  # (B, 9, S)
    patches = jnp.pad(patches, ((0, 0), (0, 0), (0, S_pad - S)))

    C = params["conv_w"].shape[0]
    wconv = params["conv_w"][:, 0].reshape(C, 9).astype(jnp.bfloat16)
    bconv = params["conv_b"].reshape(C, 1)

    # kernel 1: fused stem + SiLU + GeM ^p spatial sum -> (B, C, 1)
    psum = stem_gem_pow_sum(patches, params["gem_p"], wconv, bconv,
                            ts=ts, s_total=S)

    # head: collapse the two Linears (no nonlinearity between them) into one matmul
    N = params["fc_w"].shape[0]
    w_comb = jnp.dot(params["emb_w"].T, params["fc_w"].T, precision=hi)     # (C, N)
    b_comb = jnp.dot(params["emb_b"], params["fc_w"].T, precision=hi) + params["fc_b"]

    Np = _round_up(N, 128)
    Bp = _round_up(B, 8)
    tb = Bp if Bp <= 128 else 128
    Bp = _round_up(Bp, tb)

    psum2 = jnp.pad(psum[:, :, 0], ((0, Bp - B), (0, 0)))                   # (Bp, C)
    w_comb = jnp.pad(w_comb, ((0, 0), (0, Np - N)))                         # (C, Np)
    b_comb = jnp.pad(b_comb, (0, Np - N)).reshape(1, Np)

    out = gem_head(psum2, params["gem_p"], w_comb, b_comb, s_total=S, tb=tb)
    return out[:B, :N]


def reference_forward(images_nchw, params):
    """Pure-JAX reference (same stand-in backbone, same bf16 dtype policy)."""
    hi = jax.lax.Precision.HIGHEST
    images = images_nchw.astype(jnp.float32)
    B, _, H, W = images.shape
    x = images[:, 0]
    Ho = (H + 2 - 3) // 2 + 1
    Wo = (W + 2 - 3) // 2 + 1
    patches = conv_taps(x, Ho, Wo).astype(jnp.bfloat16)       # (B, 9, S)
    C = params["conv_w"].shape[0]
    wconv = params["conv_w"][:, 0].reshape(C, 9).astype(jnp.bfloat16)
    z = jnp.einsum("ck,bks->bcs", wconv, patches,
                   preferred_element_type=jnp.float32)
    z = z + params["conv_b"][None, :, None]
    p = params["gem_p"][0]
    xpow = _silu_gem_pow(z, p)                                # (B, C, S) f32
    pooled = jnp.maximum(jnp.mean(xpow, axis=2), TINY) ** (1.0 / p)   # GeM
    emb = jnp.dot(pooled, params["emb_w"].T, precision=hi) + params["emb_b"]
    return jnp.dot(emb, params["fc_w"].T, precision=hi) + params["fc_b"]


if __name__ == "__main__":
    key = jax.random.PRNGKey(0)
    k_img, k_par = jax.random.split(key)

    B, H, W = 2, 48, 48            # Ho=Wo=24 -> S=576
    C_FEAT, EMB, NUM_CLASSES = 32, 64, 24

    # images: NCHW with 1 channel (the module rewrites conv_stem to in_channels=1)
    images = jax.random.normal(k_img, (B, 1, H, W), jnp.float32)
    params = init_params(k_par, c_feat=C_FEAT, embedding_size=EMB,
                         num_classes=NUM_CLASSES)

    ref = reference_forward(images, params)

    # Big-tile config (what production uses): single spatial grid step per image.
    out = jax.block_until_ready(birdclef_forward(images, params))
    # Small-tile config: exercises multi-step GeM accumulation + final-tile masking.
    out_small = jax.block_until_ready(birdclef_forward(images, params, ts_max=256))

    for o in (out, out_small):
        assert o.shape == (B, NUM_CLASSES), o.shape
        assert bool(jnp.all(jnp.isfinite(o)))
        assert jnp.allclose(o, ref, rtol=2e-2, atol=2e-2), (
            float(jnp.max(jnp.abs(o - ref))))

    print("KERNEL_OK")
</pallas_src>

<mosaic_0001>
module attributes {stable_mosaic.version = 11 : i64} {
  func.func @stem_gem_kernel(%arg0: i32, %arg1: i32, %arg2: memref<1xf32, #tpu.memory_space<smem>>, %arg3: memref<1x9x640xbf16, #tpu.memory_space<vmem>>, %arg4: memref<32x9xbf16, #tpu.memory_space<vmem>>, %arg5: memref<32x1xf32, #tpu.memory_space<vmem>>, %arg6: memref<1x32x1xf32, #tpu.memory_space<vmem>>, %arg7: memref<32x1xf32, #tpu.memory_space<vmem>>) attributes {dimension_semantics = [#tpu.dimension_semantics<parallel>, #tpu.dimension_semantics<arbitrary>], iteration_bounds = array<i64: 2, 1>, scalar_prefetch = 1 : i64, scratch_operands = 1 : i64, tpu.core_type = #tpu.core_type<tc>, window_params = [{transform_indices = @transform_0, window_bounds = array<i64: 1, 9, 640>}, {pipeline_mode = #tpu.pipeline_mode<synchronous>, transform_indices = @transform_1, window_bounds = array<i64: 32, 9>}, {pipeline_mode = #tpu.pipeline_mode<synchronous>, transform_indices = @transform_2, window_bounds = array<i64: 32, 1>}, {transform_indices = @transform_3, window_bounds = array<i64: 1, 32, 1>}]} {
    %c0_i32 = arith.constant 0 : i32
    %0 = arith.cmpi eq, %arg1, %c0_i32 : i32
    %1 = arith.extui %0 : i1 to i32
    %c0_i32_0 = arith.constant 0 : i32
    %2 = arith.cmpi ne, %1, %c0_i32_0 : i32
    scf.if %2 {
      %cst_14 = arith.constant 0.000000e+00 : f32
      %32 = vector.broadcast %cst_14 : f32 to vector<32x1xf32>
      %c0_15 = arith.constant 0 : index
      %c0_16 = arith.constant 0 : index
      %33 = vector.load %arg7[%c0_15, %c0_16] : memref<32x1xf32, #tpu.memory_space<vmem>>, vector<32x1xf32>
      tpu.vector_store %arg7[%c0_15, %c0_16], %32 {strides = array<i32>} : memref<32x1xf32, #tpu.memory_space<vmem>>, vector<32x1xf32>,
    } else {
    }
    %c0 = arith.constant 0 : index
    %c0_1 = arith.constant 0 : index
    %c0_2 = arith.constant 0 : index
    %3 = vector.load %arg3[%c0, %c0_1, %c0_2] : memref<1x9x640xbf16, #tpu.memory_space<vmem>>, vector<1x9x640xbf16>
    %4 = vector.shape_cast %3 : vector<1x9x640xbf16> to vector<9x640xbf16>
    %c0_3 = arith.constant 0 : index
    %c0_4 = arith.constant 0 : index
    %5 = vector.load %arg4[%c0_3, %c0_4] : memref<32x9xbf16, #tpu.memory_space<vmem>>, vector<32x9xbf16>
    %cst = arith.constant dense<0.000000e+00> : vector<32x640xf32>
    %6 = tpu.matmul %5, %4, %cst {dimension_numbers = #tpu.dot_dimension_numbers<[1], [0], [0], [1], [0, 0, 1, 1], [], []>} : vector<32x9xbf16>, vector<9x640xbf16>, vector<32x640xf32> -> vector<32x640xf32>
    %c0_5 = arith.constant 0 : index
    %c0_6 = arith.constant 0 : index
    %7 = vector.load %arg5[%c0_5, %c0_6] : memref<32x1xf32, #tpu.memory_space<vmem>>, vector<32x1xf32>
    %8 = vector.broadcast %7 : vector<32x1xf32> to vector<32x640xf32>
    %9 = arith.addf %6, %8 : vector<32x640xf32>
    %c0_7 = arith.constant 0 : index
    %10 = memref.load %arg2[%c0_7] : memref<1xf32, #tpu.memory_space<smem>>
    %11 = arith.truncf %9 : vector<32x640xf32> to vector<32x640xbf16>
    %12 = arith.negf %11 : vector<32x640xbf16>
    %13 = math.exp %12 : vector<32x640xbf16>
    %cst_8 = arith.constant 1.000000e+00 : bf16
    %14 = vector.broadcast %cst_8 : bf16 to vector<32x640xbf16>
    %15 = arith.addf %14, %13 : vector<32x640xbf16>
    %16 = arith.divf %14, %15 : vector<32x640xbf16>
    %17 = arith.mulf %11, %16 : vector<32x640xbf16>
    %cst_9 = arith.constant 9.983770e-07 : bf16
    %18 = vector.broadcast %cst_9 : bf16 to vector<32x640xbf16>
    %19 = arith.maximumf %17, %18 : vector<32x640xbf16>
    %20 = arith.truncf %10 : f32 to bf16
    %21 = math.log %19 : vector<32x640xbf16>
    %22 = vector.broadcast %20 : bf16 to vector<32x640xbf16>
    %23 = arith.mulf %22, %21 : vector<32x640xbf16>
    %24 = math.exp %23 : vector<32x640xbf16>
    %25 = arith.extf %24 : vector<32x640xbf16> to vector<32x640xf32>
    %c0_i32_10 = arith.constant 0 : i32
    %26 = arith.cmpi slt, %arg1, %c0_i32_10 : i32
    %27 = arith.extui %26 : i1 to i32
    %c0_i32_11 = arith.constant 0 : i32
    %28 = arith.cmpi ne, %27, %c0_i32_11 : i32
    scf.if %28 {
      %c0_14 = arith.constant 0 : index
      %c0_15 = arith.constant 0 : index
      %32 = vector.load %arg7[%c0_14, %c0_15] : memref<32x1xf32, #tpu.memory_space<vmem>>, vector<32x1xf32>
      %cst_16 = arith.constant dense<0.000000e+00> : vector<32xf32>
      %33 = vector.multi_reduction <add>, %25, %cst_16 [1] : vector<32x640xf32> to vector<32xf32>
      %34 = vector.shape_cast %33 : vector<32xf32> to vector<32x1xf32>
      %35 = arith.addf %32, %34 : vector<32x1xf32>
      %c0_17 = arith.constant 0 : index
      %c0_18 = arith.constant 0 : index
      %36 = vector.load %arg7[%c0_17, %c0_18] : memref<32x1xf32, #tpu.memory_space<vmem>>, vector<32x1xf32>
      tpu.vector_store %arg7[%c0_17, %c0_18], %35 {strides = array<i32>} : memref<32x1xf32, #tpu.memory_space<vmem>>, vector<32x1xf32>,
    } else {
    }
    %c0_i32_12 = arith.constant 0 : i32
    %29 = arith.cmpi eq, %arg1, %c0_i32_12 : i32
    %30 = arith.extui %29 : i1 to i32
    %c0_i32_13 = arith.constant 0 : i32
    %31 = arith.cmpi ne, %30, %c0_i32_13 : i32
    scf.if %31 {
      %32 = tpu.iota {dimensions = array<i32: 1>} : vector<32x640xi32>
      %c640_i32 = arith.constant 640 : i32
      %33 = arith.muli %arg1, %c640_i32 : i32
      %c576_i32 = arith.constant 576 : i32
      %34 = arith.subi %c576_i32, %33 : i32
      %35 = vector.broadcast %34 : i32 to vector<32x640xi32>
      %36 = arith.cmpi slt, %32, %35 : vector<32x640xi32>
      %cst_14 = arith.constant 0.000000e+00 : f32
      %37 = vector.broadcast %cst_14 : f32 to vector<32x640xf32>
      %38 = arith.select %36, %25, %37 : vector<32x640xi1>, vector<32x640xf32>
      %c0_15 = arith.constant 0 : index
      %c0_16 = arith.constant 0 : index
      %39 = vector.load %arg7[%c0_15, %c0_16] : memref<32x1xf32, #tpu.memory_space<vmem>>, vector<32x1xf32>
      %cst_17 = arith.constant dense<0.000000e+00> : vector<32xf32>
      %40 = vector.multi_reduction <add>, %38, %cst_17 [1] : vector<32x640xf32> to vector<32xf32>
      %41 = vector.shape_cast %40 : vector<32xf32> to vector<32x1xf32>
      %42 = arith.addf %39, %41 : vector<32x1xf32>
      %c0_18 = arith.constant 0 : index
      %c0_19 = arith.constant 0 : index
      %43 = vector.load %arg7[%c0_18, %c0_19] : memref<32x1xf32, #tpu.memory_space<vmem>>, vector<32x1xf32>
      tpu.vector_store %arg7[%c0_18, %c0_19], %42 {strides = array<i32>} : memref<32x1xf32, #tpu.memory_space<vmem>>, vector<32x1xf32>,
      %c0_20 = arith.constant 0 : index
      %c0_21 = arith.constant 0 : index
      %44 = vector.load %arg7[%c0_20, %c0_21] : memref<32x1xf32, #tpu.memory_space<vmem>>, vector<32x1xf32>
      %45 = vector.shape_cast %44 : vector<32x1xf32> to vector<1x32x1xf32>
      %c0_22 = arith.constant 0 : index
      %c0_23 = arith.constant 0 : index
      %c0_24 = arith.constant 0 : index
      %46 = vector.load %arg6[%c0_22, %c0_23, %c0_24] : memref<1x32x1xf32, #tpu.memory_space<vmem>>, vector<1x32x1xf32>
      tpu.vector_store %arg6[%c0_22, %c0_23, %c0_24], %45 {strides = array<i32>} : memref<1x32x1xf32, #tpu.memory_space<vmem>>, vector<1x32x1xf32>,
    } else {
    }
    return
  }
  func.func @transform_0(%arg0: i32, %arg1: i32, %arg2: memref<1xf32, #tpu.memory_space<smem>>) -> (i32, i32, i32) {
    %c0_i32 = arith.constant 0 : i32
    %c0_i32_0 = arith.constant 0 : i32
    return %arg0, %c0_i32, %arg1 : i32, i32, i32
  }
  func.func @transform_1(%arg0: i32, %arg1: i32, %arg2: memref<1xf32, #tpu.memory_space<smem>>) -> (i32, i32) {
    %c0_i32 = arith.constant 0 : i32
    %c0_i32_0 = arith.constant 0 : i32
    %c0_i32_1 = arith.constant 0 : i32
    return %c0_i32, %c0_i32_0 : i32, i32
  }
  func.func @transform_2(%arg0: i32, %arg1: i32, %arg2: memref<1xf32, #tpu.memory_space<smem>>) -> (i32, i32) {
    %c0_i32 = arith.constant 0 : i32
    %c0_i32_0 = arith.constant 0 : i32
    %c0_i32_1 = arith.constant 0 : i32
    return %c0_i32, %c0_i32_0 : i32, i32
  }
  func.func @transform_3(%arg0: i32, %arg1: i32, %arg2: memref<1xf32, #tpu.memory_space<smem>>) -> (i32, i32, i32) {
    %c0_i32 = arith.constant 0 : i32
    %c0_i32_0 = arith.constant 0 : i32
    %c0_i32_1 = arith.constant 0 : i32
    return %arg0, %c0_i32, %c0_i32_0 : i32, i32, i32
  }
}

module attributes {stable_mosaic.version = 11 : i64} {
  func.func @gem_head_kernel(%arg0: i32, %arg1: memref<1xf32, #tpu.memory_space<smem>>, %arg2: memref<8x32xf32, #tpu.memory_space<vmem>>, %arg3: memref<32x128xf32, #tpu.memory_space<vmem>>, %arg4: memref<1x128xf32, #tpu.memory_space<vmem>>, %arg5: memref<8x128xf32, #tpu.memory_space<vmem>>) attributes {dimension_semantics = [#tpu.dimension_semantics<parallel>], iteration_bounds = array<i64: 1>, scalar_prefetch = 1 : i64, scratch_operands = 0 : i64, tpu.core_type = #tpu.core_type<tc>, window_params = [{transform_indices = @transform_0, window_bounds = array<i64: 8, 32>}, {pipeline_mode = #tpu.pipeline_mode<synchronous>, transform_indices = @transform_1, window_bounds = array<i64: 32, 128>}, {pipeline_mode = #tpu.pipeline_mode<synchronous>, transform_indices = @transform_2, window_bounds = array<i64: 1, 128>}, {transform_indices = @transform_3, window_bounds = array<i64: 8, 128>}]} {
    %c0 = arith.constant 0 : index
    %0 = memref.load %arg1[%c0] : memref<1xf32, #tpu.memory_space<smem>>
    %c0_0 = arith.constant 0 : index
    %c0_1 = arith.constant 0 : index
    %1 = vector.load %arg2[%c0_0, %c0_1] : memref<8x32xf32, #tpu.memory_space<vmem>>, vector<8x32xf32>
    %cst = arith.constant 0.00173611112 : f32
    %2 = vector.broadcast %cst : f32 to vector<8x32xf32>
    %3 = arith.mulf %1, %2 : vector<8x32xf32>
    %cst_2 = arith.constant 1.000000e-30 : f32
    %4 = vector.broadcast %cst_2 : f32 to vector<8x32xf32>
    %5 = arith.maximumf %3, %4 : vector<8x32xf32>
    %6 = math.log %5 : vector<8x32xf32>
    %cst_3 = arith.constant 1.000000e+00 : f32
    %7 = arith.divf %cst_3, %0 : f32
    %8 = vector.broadcast %7 : f32 to vector<8x32xf32>
    %9 = arith.mulf %6, %8 : vector<8x32xf32>
    %10 = math.exp %9 : vector<8x32xf32>
    %c0_4 = arith.constant 0 : index
    %c0_5 = arith.constant 0 : index
    %11 = vector.load %arg3[%c0_4, %c0_5] : memref<32x128xf32, #tpu.memory_space<vmem>>, vector<32x128xf32>
    %cst_6 = arith.constant dense<0.000000e+00> : vector<8x128xf32>
    %12 = tpu.matmul %10, %11, %cst_6 {dimension_numbers = #tpu.dot_dimension_numbers<[1], [0], [0], [1], [0, 0, 1, 1], [], []>} : vector<8x32xf32>, vector<32x128xf32>, vector<8x128xf32> -> vector<8x128xf32>
    %c0_7 = arith.constant 0 : index
    %c0_8 = arith.constant 0 : index
    %13 = vector.load %arg4[%c0_7, %c0_8] : memref<1x128xf32, #tpu.memory_space<vmem>>, vector<1x128xf32>
    %14 = vector.broadcast %13 : vector<1x128xf32> to vector<8x128xf32>
    %15 = arith.addf %12, %14 : vector<8x128xf32>
    %c0_9 = arith.constant 0 : index
    %c0_10 = arith.constant 0 : index
    %16 = vector.load %arg5[%c0_9, %c0_10] : memref<8x128xf32, #tpu.memory_space<vmem>>, vector<8x128xf32>
    tpu.vector_store %arg5[%c0_9, %c0_10], %15 {strides = array<i32>} : memref<8x128xf32, #tpu.memory_space<vmem>>, vector<8x128xf32>,
    return
  }
  func.func @transform_0(%arg0: i32, %arg1: memref<1xf32, #tpu.memory_space<smem>>) -> (i32, i32) {
    %c0_i32 = arith.constant 0 : i32
    %c0_i32_0 = arith.constant 0 : i32
    return %arg0, %c0_i32 : i32, i32
  }
  func.func @transform_1(%arg0: i32, %arg1: memref<1xf32, #tpu.memory_space<smem>>) -> (i32, i32) {
    %c0_i32 = arith.constant 0 : i32
    %c0_i32_0 = arith.constant 0 : i32
    %c0_i32_1 = arith.constant 0 : i32
    return %c0_i32, %c0_i32_0 : i32, i32
  }
  func.func @transform_2(%arg0: i32, %arg1: memref<1xf32, #tpu.memory_space<smem>>) -> (i32, i32) {
    %c0_i32 = arith.constant 0 : i32
    %c0_i32_0 = arith.constant 0 : i32
    %c0_i32_1 = arith.constant 0 : i32
    return %c0_i32, %c0_i32_0 : i32, i32
  }
  func.func @transform_3(%arg0: i32, %arg1: memref<1xf32, #tpu.memory_space<smem>>) -> (i32, i32) {
    %c0_i32 = arith.constant 0 : i32
    %c0_i32_0 = arith.constant 0 : i32
    return %arg0, %c0_i32 : i32, i32
  }
}

</mosaic_0001>

<llo_original>
// kernel: birdclef_forward.3
$region0: #{birdclef_forward.3}
  #allocation0 [shape = 'u32[]', space=smem, size = 0x4, offset = 0x4, fixed_abs, tag = 'smem constant byte address 0x4 - core index']
  #allocation1 [shape = 'u32[144,128]{1,0:T(1,128)}', space=vmem, size = 0x12000, scoped, tag = 'internal scratch']
  #allocation2 [shape = 's32[1]{0}', space=sflag, size = 0x4, scoped, tag = 'scoped memory for birdclef_forward.3']
  #allocation3 [shape = 'f32[1]{0:T(128)S(6)}', space=smem, size = 0x200, scoped, tag = 'prefetched SMEM operand 0']
  %s0 = inlined_call_operand.<no memory space> [shape: f32[1], index: 0, kind: input, shape index: {}]
  %s1 = inlined_call_operand.vmem [shape: f32[8,32], index: 1, kind: input, shape index: {}]
  %s2 = inlined_call_operand.vmem [shape: f32[32,128], index: 2, kind: input, shape index: {}]
  %s3 = inlined_call_operand.vmem [shape: f32[1,128], index: 3, kind: input, shape index: {}]
  %s4 = inlined_call_operand.vmem [shape: f32[8,128], index: 4, kind: output, shape index: {}]
  %s5 = sld [smem:[#allocation0]]
  $region22: #{birdclef_forward.3} parent=0
    _
  %s7 = ssub.s32 1, %s5
  %s8 = scalar_select 0, %s7, %s5
  %9 = sst [smem:[#allocation3]] %s0
  // Predicated region
  $region2: #{birdclef_forward.3} parent=0 // pred_check
    _
  $region3: #{birdclef_forward.3} parent=0 // pred_check_branch
    %11 = sbr.rel (0) target = $region5
  $region4: #{birdclef_forward.3} parent=0 // pred_region
    _
  $region5: #{birdclef_forward.3} parent=0 // pred_fallthru
    _
  // Predicated region
  $region6: #{birdclef_forward.3} parent=0 // pred_check
    _
  $region7: #{birdclef_forward.3} parent=0 // pred_check_branch
    %13 = sbr.rel (0) target = $region9
  $region8: #{birdclef_forward.3} parent=0 // pred_region
    _
  $region9: #{birdclef_forward.3} parent=0 // pred_fallthru
    _
  // Predicated region
  $region10: #{birdclef_forward.3} parent=0 // pred_check
    _
  $region11: #{birdclef_forward.3} parent=0 // pred_check_branch
    %15 = sbr.rel (0) target = $region13
  $region12: #{birdclef_forward.3} parent=0 // pred_region
    _
  $region13: #{birdclef_forward.3} parent=0 // pred_fallthru
    _
  %s16 = sld [smem:[#allocation3]]
  %v17 = vld [vmem:[%s1] sm:$0xff]
  %v18 = vmul.f32 %v17, 0.0017361111
  %v19 = vmax.f32 %v18, 1e-30
  %v20 = vlog2.pop %v19
  %v21 = vmul.f32 %v20, 0.6931472
  %v22 = vstv %s16
  %v23 = vrcp.pop %v22
  %s24 = vtos %v23
  %v25 = vstv %s24
  %v26 = vmul.f32 %v21, %v25
  %v27 = vmul.f32 %v26, 1.442695
  %v28 = vpow.pop %v27
  %v29 = vld [vmem:[%s2] sm:$0xff]
  %v30 = vld [vmem:[%s2 + $0x8] sm:$0xff]
  %v31 = vld [vmem:[%s2 + $0x10] sm:$0xff]
  %v32 = vld [vmem:[%s2 + $0x18] sm:$0xff]
  %v33 = vld [vmem:[%s3] sm:$0x1]
  %v35 = vlaneseq
  %v36 = vshrl.u32 %v35, 7
  %v37 = vsub.s32 0, %v36
  %v38 = vrot.slane %v33, %v37
  %vm40 = vcmask 261120
  %v42 = vsel %vm40, %v28, 0
  %44 = vmatprep.subr.mxu0 0.0
  %45 = vmatpush1.msra.mxu0 %v29
  %46 = vmatprep.subr.mxu0 0.0
  %47 = vmatpush1.msra.mxu0 %v30
  %48 = vmatprep.subr.mxu0 0.0
  %49 = vmatpush1.msra.mxu0 %v31
  %50 = vmatprep.subr.mxu0 0.0
  %51 = vmatpush1.msra.mxu0 %v32
  %52 = vmatprep.subr.mxu0 0.0
  %53 = vmatpush1.msra.mxu0 0.0
  %54 = vmatprep.subr.mxu0 0.0
  %55 = vmatpush1.msra.mxu0 0.0
  %56 = vmatprep.subr.mxu0 0.0
  %57 = vmatpush1.msra.mxu0 0.0
  %58 = vmatprep.subr.mxu0 0.0
  %59 = vmatpush1.msra.mxu0 0.0
  %60 = vmatprep.subr.mxu0 0.0
  %61 = vmatpush1.msra.mxu0 0.0
  %62 = vmatprep.subr.mxu0 0.0
  %63 = vmatpush1.msra.mxu0 0.0
  %64 = vmatprep.subr.mxu0 0.0
  %65 = vmatpush1.msra.mxu0 0.0
  %66 = vmatprep.subr.mxu0 0.0
  %67 = vmatpush1.msra.mxu0 0.0
  %68 = vmatprep.subr.mxu0 0.0
  %69 = vmatpush1.msra.mxu0 0.0
  %70 = vmatprep.subr.mxu0 0.0
  %71 = vmatpush1.msra.mxu0 0.0
  %72 = vmatprep.subr.mxu0 0.0
  %73 = vmatpush1.msra.mxu0 0.0
  %74 = vmatprep.subr.mxu0 0.0
  %75 = vmatpush1.msra.mxu0 0.0
  %76 = vmatprep.subr.mxu0 0.0
  %77 = vmatpush1.msra.mxu0 0.0
  %78 = vmatprep.subr.mxu0 0.0
  %79 = vmatpush1.msra.mxu0 0.0
  %80 = vmatprep.subr.mxu0 0.0
  %81 = vmatpush1.msra.mxu0 0.0
  %82 = vmatprep.subr.mxu0 0.0
  %83 = vmatpush1.msra.mxu0 0.0
  %84 = vmatprep.subr.mxu0 0.0
  %85 = vmatpush1.msra.mxu0 0.0
  %86 = vmatprep.subr.mxu0 0.0
  %87 = vmatpush1.msra.mxu0 0.0
  %88 = vmatprep.subr.mxu0 0.0
  %89 = vmatpush1.msra.mxu0 0.0
  %90 = vmatprep.subr.mxu0 0.0
  %91 = vmatpush1.msra.mxu0 0.0
  %92 = vmatprep.subr.mxu0 0.0
  %93 = vmatpush1.msra.mxu0 0.0
  %94 = vmatprep.subr.mxu0 0.0
  %95 = vmatpush1.msra.mxu0 0.0
  %96 = vmatprep.subr.mxu0 0.0
  %97 = vmatpush1.msra.mxu0 0.0
  %98 = vmatprep.subr.mxu0 0.0
  %99 = vmatpush1.msra.mxu0 0.0
  %100 = vmatprep.subr.mxu0 0.0
  %101 = vmatpush1.msra.mxu0 0.0
  %102 = vmatprep.subr.mxu0 0.0
  %103 = vmatpush1.msra.mxu0 0.0
  %104 = vmatprep.subr.mxu0 0.0
  %105 = vmatpush1.msra.mxu0 0.0
  %106 = vmatprep.subr.mxu0 0.0
  %107 = vmatpush1.msra.mxu0 0.0
  %108 = vmatprep.mubr.f32.mxu0 0.0
  %109 = vmatmul.mubr.f32.gmra.mrb[0].mxu0 %v42
  %v110 = vpop.f32.mrb[0].mxu0
  %v111 = vadd.f32 %v38, %v110
  %v112 = vpop.f32.mrb[0].mxu0
  %113 = vdwg.mxu0
  %114 = vst [vmem:[%s4] sm:$0xff] %v111
  // Predicated region
  $region14: #{birdclef_forward.3} parent=0 // pred_check
    _
  $region15: #{birdclef_forward.3} parent=0 // pred_check_branch
    %116 = sbr.rel (0) target = $region17
  $region16: #{birdclef_forward.3} parent=0 // pred_region
    _
  $region17: #{birdclef_forward.3} parent=0 // pred_fallthru
    _
  // Predicated region
  $region18: #{birdclef_forward.3} parent=0 // pred_check
    _
  $region19: #{birdclef_forward.3} parent=0 // pred_check_branch
    %118 = sbr.rel (0) target = $region21
  $region20: #{birdclef_forward.3} parent=0 // pred_region
    _
  $region21: #{birdclef_forward.3} parent=0 // pred_fallthru
    _

// kernel: birdclef_forward.2
$region0: #{birdclef_forward.2}
  #allocation0 [shape = 'u32[]', space=smem, size = 0x4, offset = 0x4, fixed_abs, tag = 'smem constant byte address 0x4 - core index']
  #allocation1 [shape = 'u32[144,128]{1,0:T(1,128)}', space=vmem, size = 0x12000, scoped, tag = 'internal scratch']
  #allocation2 [shape = 'f32[32,1]{1,0:T(8,128)}', space=vmem, size = 0x4000, scoped, tag = 'scratch operand']
  #allocation3 [shape = 's32[1]{0}', space=sflag, size = 0x4, scoped, tag = 'scoped memory for birdclef_forward.2']
  #allocation4 [shape = 'f32[1]{0:T(128)S(6)}', space=smem, size = 0x200, scoped, tag = 'prefetched SMEM operand 0']
  %s0 = inlined_call_operand.<no memory space> [shape: f32[1], index: 0, kind: input, shape index: {}]
  %s1 = inlined_call_operand.vmem [shape: bf16[2,9,640], index: 1, kind: input, shape index: {}]
  %s2 = inlined_call_operand.vmem [shape: bf16[32,9], index: 2, kind: input, shape index: {}]
  %s3 = inlined_call_operand.vmem [shape: f32[32,1], index: 3, kind: input, shape index: {}]
  %s4 = inlined_call_operand.vmem [shape: f32[2,32,1], index: 4, kind: output, shape index: {}]
  %s5 = sld [smem:[#allocation0]]
  $region57: #{birdclef_forward.2} parent=0
    _
  %s7 = ssub.s32 1, %s5
  %s8 = scalar_select 0, %s7, %s5
  %9 = sst [smem:[#allocation4]] %s0
  loop: start=0, step=1, limit=4
  $region2: #{birdclef_forward.2} parent=0 // loop_pre_header
    _
  $region3: #{birdclef_forward.2} parent=0 // loop_header
    %s11 = sphi 0, %s15
    %p12 = scmp.ge.s32.totalorder %s11, 4
    %s18 = sphi 0, %s30
    %s19 = sphi 0, %s26
    %s20 = sphi 0, %s18
    %s21 = sphi 0, %s19
    %s22 = sphi 0, %s20
    %s23 = sphi 0, %s21
    %s35 = sphi 0, %s37
    %s38 = sphi 0, %s35
    %s39 = sphi 0, %s38
    %s55 = sphi 0, %s39
    %s59 = sphi 0, %s59
    %s61 = sphi 0, %s59
    %s62 = sphi 0, %s61
    %s76 = sphi 0, %s62
    %s80 = sphi 0, %s80
    %s82 = sphi 0, %s80
    %s83 = sphi 0, %s82
    %s97 = sphi 0, %s83
    %s103 = sphi 0, %s105
    %s106 = sphi 0, %s103
    %s107 = sphi 0, %s106
    %s123 = sphi 0, %s107
  $region4: #{birdclef_forward.2} parent=0 // loop_header_branch
    %14 = sbr.rel (%p12) target = $region8
  $region5: #{birdclef_forward.2} parent=0 // loop_body
    %s16 = ssub.s32 %s11, 1
    %s17 = ssub.s32 %s11, 2
    %s24 = sadd.s32 1, %s19
    %p25 = scmp.ge.s32.totalorder %s24, 1
    %s26 = scalar_select %p25, 0, %s24
    %s27 = sadd.s32 1, %s18
    %s28 = scalar_select %p25, %s27, %s18
    %p29 = scmp.ge.s32.totalorder %s28, 2
    %s30 = scalar_select %p29, 0, %s28
    %s31 = ssub.s32 %s18, %s30
    %s32 = ssub.s32 %s19, %s26
    %s33 = sor.u32 %s31, %s32
    %p34 = scmp.eq.s32.totalorder %s33, 0
    %s36 = sadd.s32 %s35, 1
    %s37 = scalar_select %p34, %s35, %s36
    %p40 = pneg %p34
    %p41 = scmp.eq.s32.totalorder %s11, 1
    %p42 = por %p40, %p41
    %p43 = scmp.ne.s32.totalorder %s35, %s38
    %p44 = scmp.eq.s32.totalorder %s11, 0
    %p45 = por %p43, %p44
    %p46 = scmp.ne.s32.totalorder %s35, %s38
    %p47 = scmp.eq.s32.totalorder %s16, 1
    %p48 = por %p46, %p47
    %p49 = scmp.ne.s32.totalorder %s38, %s39
    %p50 = scmp.eq.s32.totalorder %s16, 0
    %p51 = por %p49, %p50
    %p52 = scmp.ne.s32.totalorder %s38, %s39
    %p53 = scmp.eq.s32.totalorder %s17, 1
    %p54 = por %p52, %p53
    %p56 = scmp.ne.s32.totalorder %s39, %s55
    %p57 = scmp.eq.s32.totalorder %s17, 0
    %p58 = por %p56, %p57
    %s60 = sadd.s32 %s59, 1
    %p63 = scmp.eq.s32.totalorder %s11, 1
    %p64 = scmp.ne.s32.totalorder %s59, %s61
    %p65 = scmp.eq.s32.totalorder %s11, 0
    %p66 = por %p64, %p65
    %p67 = scmp.ne.s32.totalorder %s59, %s61
    %p68 = scmp.eq.s32.totalorder %s16, 1
    %p69 = por %p67, %p68
    %p70 = scmp.ne.s32.totalorder %s61, %s62
    %p71 = scmp.eq.s32.totalorder %s16, 0
    %p72 = por %p70, %p71
    %p73 = scmp.ne.s32.totalorder %s61, %s62
    %p74 = scmp.eq.s32.totalorder %s17, 1
    %p75 = por %p73, %p74
    %p77 = scmp.ne.s32.totalorder %s62, %s76
    %p78 = scmp.eq.s32.totalorder %s17, 0
    %p79 = por %p77, %p78
    %s81 = sadd.s32 %s80, 1
    %p84 = scmp.eq.s32.totalorder %s11, 1
    %p85 = scmp.ne.s32.totalorder %s80, %s82
    %p86 = scmp.eq.s32.totalorder %s11, 0
    %p87 = por %p85, %p86
    %p88 = scmp.ne.s32.totalorder %s80, %s82
    %p89 = scmp.eq.s32.totalorder %s16, 1
    %p90 = por %p88, %p89
    %p91 = scmp.ne.s32.totalorder %s82, %s83
    %p92 = scmp.eq.s32.totalorder %s16, 0
    %p93 = por %p91, %p92
    %p94 = scmp.ne.s32.totalorder %s82, %s83
    %p95 = scmp.eq.s32.totalorder %s17, 1
    %p96 = por %p94, %p95
    %p98 = scmp.ne.s32.totalorder %s83, %s97
    %p99 = scmp.eq.s32.totalorder %s17, 0
    %p100 = por %p98, %p99
    %s101 = ssub.s32 %s18, %s30
    %p102 = scmp.eq.s32.totalorder %s101, 0
    %s104 = sadd.s32 %s103, 1
    %s105 = scalar_select %p102, %s103, %s104
    %p108 = pneg %p102
    %p109 = scmp.eq.s32.totalorder %s11, 1
    %p110 = por %p108, %p109
    %p111 = scmp.ne.s32.totalorder %s103, %s106
    %p112 = scmp.eq.s32.totalorder %s11, 0
    %p113 = por %p111, %p112
    %p114 = scmp.ne.s32.totalorder %s103, %s106
    %p115 = scmp.eq.s32.totalorder %s16, 1
    %p116 = por %p114, %p115
    %p117 = scmp.ne.s32.totalorder %s106, %s107
    %p118 = scmp.eq.s32.totalorder %s16, 0
    %p119 = por %p117, %p118
    %p120 = scmp.ne.s32.totalorder %s106, %s107
    %p121 = scmp.eq.s32.totalorder %s17, 1
    %p122 = por %p120, %p121
    %p124 = scmp.ne.s32.totalorder %s107, %s123
    %p125 = scmp.eq.s32.totalorder %s17, 0
    %p126 = por %p124, %p125
    %p127 = scmp.le.s32.totalorder 1, %s11
    %p128 = scmp.lt.s32.totalorder %s11, 3
    %p129 = pnand %p127, %p128
    %p130 = pneg %p129
    // Predicated region
    $region9: #{birdclef_forward.2} parent=5 // pred_check
      _
    $region10: #{birdclef_forward.2} parent=5 // pred_check_branch
      %132 = sbr.rel (%p129) target = $region12
    $region11: #{birdclef_forward.2} parent=5 // pred_region
      %s133 = ssub.s32 %s11, 1
      // Predicated region
      $region13: #{birdclef_forward.2} parent=11 // pred_check
        %p134 = pneg %p72
      $region14: #{birdclef_forward.2} parent=11 // pred_check_branch
        %136 = sbr.rel (%p134) target = $region16
      $region15: #{birdclef_forward.2} parent=11 // pred_region
        _
      $region16: #{birdclef_forward.2} parent=11 // pred_fallthru
        _
      // Predicated region
      $region17: #{birdclef_forward.2} parent=11 // pred_check
        %p137 = pneg %p93
      $region18: #{birdclef_forward.2} parent=11 // pred_check_branch
        %139 = sbr.rel (%p137) target = $region20
      $region19: #{birdclef_forward.2} parent=11 // pred_region
        _
      $region20: #{birdclef_forward.2} parent=11 // pred_fallthru
        _
    $region12: #{birdclef_forward.2} parent=5 // pred_fallthru
      _
    %p140 = scmp.lt.s32.totalorder %s11, 2
    // Predicated region
    $region21: #{birdclef_forward.2} parent=5 // pred_check
      %p141 = pneg %p140
    $region22: #{birdclef_forward.2} parent=5 // pred_check_branch
      %143 = sbr.rel (%p141) target = $region24
    $region23: #{birdclef_forward.2} parent=5 // pred_region
      // Predicated region
      $region25: #{birdclef_forward.2} parent=23 // pred_check
        %p144 = pneg %p45
      $region26: #{birdclef_forward.2} parent=23 // pred_check_branch
        %146 = sbr.rel (%p144) target = $region28
      $region27: #{birdclef_forward.2} parent=23 // pred_region
        %s147 = smul.u32 5, %s19
        %p148 = scmp.lt.s32.totalorder %s18, 1
        %s149 = scalar_select %p148, %s18, 1
        %p150 = scmp.lt.s32.totalorder %s147, 4
        %s151 = scalar_select %p150, %s147, 4
        %s152 = smul.addr %s149, 10
        %s153 = sadd.s32 %s151, %s152
        %s154 = smul.addr %s153, 4
        %s155 = scalar_lea.vmem %s1, %s154
        %s156 = smul.u32 5, %s19
      $region28: #{birdclef_forward.2} parent=23 // pred_fallthru
        _
    $region24: #{birdclef_forward.2} parent=5 // pred_fallthru
      _
    %p157 = scmp.le.s32.totalorder 1, %s11
    %p158 = scmp.lt.s32.totalorder %s11, 3
    %p159 = pnand %p157, %p158
    %p160 = pneg %p159
    // Predicated region
    $region29: #{birdclef_forward.2} parent=5 // pred_check
      _
    $region30: #{birdclef_forward.2} parent=5 // pred_check_branch
      %162 = sbr.rel (%p159) target = $region32
    $region31: #{birdclef_forward.2} parent=5 // pred_region
      %s163 = ssub.s32 %s11, 1
      %s164 = smul.u32 5, %s21
      %p165 = scmp.lt.s32.totalorder %s20, 1
      %s166 = scalar_select %p165, %s20, 1
      %p167 = scmp.lt.s32.totalorder %s164, 4
      %s168 = scalar_select %p167, %s164, 4
      %s169 = smul.addr %s166, 10
      %s170 = sadd.s32 %s168, %s169
      %s171 = smul.addr %s170, 4
      %s172 = scalar_lea.vmem %s1, %s171
      %p173 = pneg %p51
      %p174 = pneg %p48
      %p175 = pneg %p72
      %p176 = pneg %p69
      %p177 = pneg %p93
      %p178 = pneg %p90
      %p179 = pneg %p119
      %p180 = pneg %p116
      %p181 = scmp.lt.s32.totalorder %s20, 1
      %s182 = scalar_select %p181, %s20, 1
      %s183 = smul.addr %s182, 4
      %s184 = smul.addr %s183, 8
      %s185 = scalar_lea.vmem %s4, %s184
      %s186 = smul.u32 5, %s21
      %p187 = scmp.lt.s32.totalorder %s20, 1
      %s188 = scalar_select %p187, %s20, 1
      %p189 = scmp.lt.s32.totalorder %s186, 4
      %s190 = scalar_select %p189, %s186, 4
      %s191 = smul.addr %s188, 10
      %s192 = sadd.s32 %s190, %s191
      %s193 = smul.addr %s192, 4
      %s194 = scalar_lea.vmem %s1, %s193
      %s195 = smul.u32 5, %s21
      %p196 = scmp.lt.s32.totalorder %s20, 1
      %s197 = scalar_select %p196, %s20, 1
      %s198 = smul.addr %s197, 4
      %s199 = smul.addr %s198, 8
      %s200 = scalar_lea.vmem %s4, %s199
      %p204 = scmp.eq.s32.totalorder %s21, 0
      // Predicated region
      $region33: #{birdclef_forward.2} parent=31 // pred_check
        %p205 = pneg %p204
      $region34: #{birdclef_forward.2} parent=31 // pred_check_branch
        %207 = sbr.rel (%p205) target = $region36
      $region35: #{birdclef_forward.2} parent=31 // pred_region
        %vm208 = vcmask 7168
        %209 = vst.msk [vmem:[#allocation2] sm:$0xff] %vm208, 0.0
        %210 = vst.msk [vmem:[#allocation2 + $0x8] sm:$0xff] %vm208, 0.0
        %211 = vst.msk [vmem:[#allocation2 + $0x10] sm:$0xff] %vm208, 0.0
        %212 = vst.msk [vmem:[#allocation2 + $0x18] sm:$0xff] %vm208, 0.0
      $region36: #{birdclef_forward.2} parent=31 // pred_fallthru
        _
      %v213 = vld [vmem:[%s194] sm:$0xff]
      %v214 = vld [vmem:[%s194 + $0x8] sm:$0xff]
      %v215 = vld [vmem:[%s194 + $0x10] sm:$0xf]
      %v216 = vld [vmem:[%s194 + $0x14] sm:$0x11]
      %v217 = vld [vmem:[%s194 + $0x1c] sm:$0x11]
      %v218 = vld [vmem:[%s194 + $0x24] sm:$0x1]
      %v219 = vld [vmem:[%s2] sm:$0xf]
      %v220 = vld [vmem:[%s2 + $0x4] sm:$0xf]
      %v221 = vld [vmem:[%s2 + $0x8] sm:$0xf]
      %v222 = vld [vmem:[%s2 + $0xc] sm:$0xf]
      %v223 = vld [vmem:[%s3] sm:$0xff]
      %v224 = vld [vmem:[%s3 + $0x8] sm:$0xff]
      %v225 = vld [vmem:[%s3 + $0x10] sm:$0xff]
      %v226 = vld [vmem:[%s3 + $0x18] sm:$0xff]
      %228 = vset.pattern.permute.xlu0 0
      %229 = vperm.xlu0 %228, %v223
      %v230 = vpop.permute.xlu0 %229
      %233 = vset.pattern.permute.xlu0 0
      %234 = vperm.xlu0 %233, %v224
      %v235 = vpop.permute.xlu0 %234
      %238 = vset.pattern.permute.xlu0 0
      %239 = vperm.xlu0 %238, %v225
      %v240 = vpop.permute.xlu0 %239
      %243 = vset.pattern.permute.xlu0 0
      %244 = vperm.xlu0 %243, %v226
      %v245 = vpop.permute.xlu0 %244
      %v251 = vunpack.c.l.b16 %v219
      %v252 = vunpack.c.l.b16 %v220
      %v253 = vunpack.c.l.b16 %v221
      %v254 = vunpack.c.l.b16 %v222
      %v255 = vpack.c.b16 %v252, %v251
      %v256 = vpack.c.b16 %v254, %v253
      %v263 = vunpack.c.l.b16 %v213
      %v264 = vunpack.c.h.b16 %v213
      %v265 = vunpack.c.l.b16 %v214
      %v266 = vunpack.c.h.b16 %v214
      %v267 = vunpack.c.l.b16 %v215
      %v268 = vunpack.c.l.b16 %v216
      %v269 = vunpack.c.h.b16 %v216
      %v270 = vunpack.c.l.b16 %v217
      %v271 = vunpack.c.h.b16 %v217
      %v272 = vunpack.c.l.b16 %v218
      %v273 = vpack.c.b16 %v268, %v263
      %v274 = vpack.c.b16 %v269, %v264
      %v275 = vpack.c.b16 %v270, %v265
      %v276 = vpack.c.b16 %v271, %v266
      %v277 = vpack.c.b16 %v272, %v267
      %vm278 = vcmask 72704
      %v280 = vsel %vm278, %v255, 0
      %v283 = vsel %vm278, %v256, 0
      %vm285 = vcmask 1043456
      %vm286 = vcmask 1044480
      %v287 = vsel %vm285, 4294967295, 65535
      %v288 = vsel %vm286, %v287, 0
      %v290 = vand.u32 %v273, %v288
      %v293 = vand.u32 %v274, %v288
      %v296 = vand.u32 %v275, %v288
      %v299 = vand.u32 %v276, %v288
      %v302 = vand.u32 %v277, %v288
      %304 = vmatprep.subr.bf16.mxu0 %v293
      %305 = vmatpush1.bf16.msra.mxu0 %v290
      %306 = vmatprep.subr.bf16.mxu0 0
      %307 = vmatpush1.bf16.msra.mxu0 0
      %308 = vmatprep.subr.bf16.mxu0 0
      %309 = vmatpush1.bf16.msra.mxu0 0
      %310 = vmatprep.subr.bf16.mxu0 0
      %311 = vmatpush1.bf16.msra.mxu0 0
      %312 = vmatprep.subr.bf16.mxu0 0
      %313 = vmatpush1.bf16.msra.mxu0 0
      %314 = vmatprep.subr.bf16.mxu0 0
      %315 = vmatpush1.bf16.msra.mxu0 0
      %316 = vmatprep.subr.bf16.mxu0 0
      %317 = vmatpush1.bf16.msra.mxu0 0
      %318 = vmatprep.subr.bf16.mxu0 0
      %319 = vmatpush1.bf16.msra.mxu0 0
      %320 = vmatprep.subr.bf16.mxu0 0
      %321 = vmatpush1.bf16.msra.mxu0 0
      %322 = vmatprep.subr.bf16.mxu0 0
      %323 = vmatpush1.bf16.msra.mxu0 0
      %324 = vmatprep.subr.bf16.mxu0 0
      %325 = vmatpush1.bf16.msra.mxu0 0
      %326 = vmatprep.subr.bf16.mxu0 0
      %327 = vmatpush1.bf16.msra.mxu0 0
      %328 = vmatprep.subr.bf16.mxu0 0
      %329 = vmatpush1.bf16.msra.mxu0 0
      %330 = vmatprep.subr.bf16.mxu0 0
      %331 = vmatpush1.bf16.msra.mxu0 0
      %332 = vmatprep.subr.bf16.mxu0 0
      %333 = vmatpush1.bf16.msra.mxu0 0
      %334 = vmatprep.subr.bf16.mxu0 0
      %335 = vmatpush1.bf16.msra.mxu0 0
      %336 = vmatprep.mubr.bf16.mxu0 0
      %337 = vmatmul.mubr.bf16.gmra.mrb[0].mxu0 %v280
      %v338 = vpop.f32.mrb[0].mxu0
      %v339 = vadd.f32 %v230, %v338
      %v340 = vpop.f32.mrb[0].mxu0
      %v341 = vadd.f32 %v230, %v340
      %v342 = vpop.f32.mrb[0].mxu0
      %v343 = vadd.f32 %v235, %v342
      %v344 = vpop.f32.mrb[0].mxu0
      %v345 = vadd.f32 %v235, %v344
      %346 = vmatprep.mubr.bf16.mxu0 0
      %347 = vmatmul.mubr.bf16.gmra.mrb[0].mxu0 %v283
      %v348 = vpop.f32.mrb[0].mxu0
      %v349 = vadd.f32 %v240, %v348
      %v350 = vpop.f32.mrb[0].mxu0
      %v351 = vadd.f32 %v240, %v350
      %v352 = vpop.f32.mrb[0].mxu0
      %v353 = vadd.f32 %v245, %v352
      %v354 = vpop.f32.mrb[0].mxu0
      %v355 = vadd.f32 %v245, %v354
      %356 = vdwg.mxu0
      %357 = vmatprep.subr.bf16.mxu0 %v299
      %358 = vmatpush1.bf16.msra.mxu0 %v296
      %359 = vmatprep.subr.bf16.mxu0 0
      %360 = vmatpush1.bf16.msra.mxu0 0
      %361 = vmatprep.subr.bf16.mxu0 0
      %362 = vmatpush1.bf16.msra.mxu0 0
      %363 = vmatprep.subr.bf16.mxu0 0
      %364 = vmatpush1.bf16.msra.mxu0 0
      %365 = vmatprep.subr.bf16.mxu0 0
      %366 = vmatpush1.bf16.msra.mxu0 0
      %367 = vmatprep.subr.bf16.mxu0 0
      %368 = vmatpush1.bf16.msra.mxu0 0
      %369 = vmatprep.subr.bf16.mxu0 0
      %370 = vmatpush1.bf16.msra.mxu0 0
      %371 = vmatprep.subr.bf16.mxu0 0
      %372 = vmatpush1.bf16.msra.mxu0 0
      %373 = vmatprep.subr.bf16.mxu0 0
      %374 = vmatpush1.bf16.msra.mxu0 0
      %375 = vmatprep.subr.bf16.mxu0 0
      %376 = vmatpush1.bf16.msra.mxu0 0
      %377 = vmatprep.subr.bf16.mxu0 0
      %378 = vmatpush1.bf16.msra.mxu0 0
      %379 = vmatprep.subr.bf16.mxu0 0
      %380 = vmatpush1.bf16.msra.mxu0 0
      %381 = vmatprep.subr.bf16.mxu0 0
      %382 = vmatpush1.bf16.msra.mxu0 0
      %383 = vmatprep.subr.bf16.mxu0 0
      %384 = vmatpush1.bf16.msra.mxu0 0
      %385 = vmatprep.subr.bf16.mxu0 0
      %386 = vmatpush1.bf16.msra.mxu0 0
      %387 = vmatprep.subr.bf16.mxu0 0
      %388 = vmatpush1.bf16.msra.mxu0 0
      %389 = vmatprep.mubr.bf16.mxu0 0
      %390 = vmatmul.mubr.bf16.gmra.mrb[0].mxu0 %v280
      %v391 = vpop.f32.mrb[0].mxu0
      %v392 = vadd.f32 %v230, %v391
      %v393 = vpop.f32.mrb[0].mxu0
      %v394 = vadd.f32 %v230, %v393
      %v395 = vpop.f32.mrb[0].mxu0
      %v396 = vadd.f32 %v235, %v395
      %v397 = vpop.f32.mrb[0].mxu0
      %v398 = vadd.f32 %v235, %v397
      %399 = vmatprep.mubr.bf16.mxu0 0
      %400 = vmatmul.mubr.bf16.gmra.mrb[0].mxu0 %v283
      %v401 = vpop.f32.mrb[0].mxu0
      %v402 = vadd.f32 %v240, %v401
      %v403 = vpop.f32.mrb[0].mxu0
      %v404 = vadd.f32 %v240, %v403
      %v405 = vpop.f32.mrb[0].mxu0
      %v406 = vadd.f32 %v245, %v405
      %v407 = vpop.f32.mrb[0].mxu0
      %v408 = vadd.f32 %v245, %v407
      %409 = vdwg.mxu0
      %410 = vmatprep.subr.bf16.mxu0 0
      %411 = vmatpush1.bf16.msra.mxu0 %v302
      %412 = vmatprep.subr.bf16.mxu0 0
      %413 = vmatpush1.bf16.msra.mxu0 0
      %414 = vmatprep.subr.bf16.mxu0 0
      %415 = vmatpush1.bf16.msra.mxu0 0
      %416 = vmatprep.subr.bf16.mxu0 0
      %417 = vmatpush1.bf16.msra.mxu0 0
      %418 = vmatprep.subr.bf16.mxu0 0
      %419 = vmatpush1.bf16.msra.mxu0 0
      %420 = vmatprep.subr.bf16.mxu0 0
      %421 = vmatpush1.bf16.msra.mxu0 0
      %422 = vmatprep.subr.bf16.mxu0 0
      %423 = vmatpush1.bf16.msra.mxu0 0
      %424 = vmatprep.subr.bf16.mxu0 0
      %425 = vmatpush1.bf16.msra.mxu0 0
      %426 = vmatprep.subr.bf16.mxu0 0
      %427 = vmatpush1.bf16.msra.mxu0 0
      %428 = vmatprep.subr.bf16.mxu0 0
      %429 = vmatpush1.bf16.msra.mxu0 0
      %430 = vmatprep.subr.bf16.mxu0 0
      %431 = vmatpush1.bf16.msra.mxu0 0
      %432 = vmatprep.subr.bf16.mxu0 0
      %433 = vmatpush1.bf16.msra.mxu0 0
      %434 = vmatprep.subr.bf16.mxu0 0
      %435 = vmatpush1.bf16.msra.mxu0 0
      %436 = vmatprep.subr.bf16.mxu0 0
      %437 = vmatpush1.bf16.msra.mxu0 0
      %438 = vmatprep.subr.bf16.mxu0 0
      %439 = vmatpush1.bf16.msra.mxu0 0
      %440 = vmatprep.subr.bf16.mxu0 0
      %441 = vmatpush1.bf16.msra.mxu0 0
      %442 = vmatprep.mubr.bf16.mxu0 0
      %443 = vmatmul.mubr.bf16.gmra.mrb[0].mxu0 %v280
      %v444 = vpop.f32.mrb[0].mxu0
      %v445 = vadd.f32 %v230, %v444
      %v446 = vpop.f32.mrb[0].mxu0
      %v447 = vpop.f32.mrb[0].mxu0
      %v448 = vadd.f32 %v235, %v447
      %v449 = vpop.f32.mrb[0].mxu0
      %450 = vmatprep.mubr.bf16.mxu0 0
      %451 = vmatmul.mubr.bf16.gmra.mrb[0].mxu0 %v283
      %v452 = vpop.f32.mrb[0].mxu0
      %v453 = vadd.f32 %v240, %v452
      %v454 = vpop.f32.mrb[0].mxu0
      %v455 = vpop.f32.mrb[0].mxu0
      %v456 = vadd.f32 %v245, %v455
      %v457 = vpop.f32.mrb[0].mxu0
      %458 = vdwg.mxu0
      %s459 = sld [smem:[#allocation4]]
      %v460 = vpack.c.bf16 %v343, %v339
      %v461 = vpack.c.bf16 %v345, %v341
      %v462 = vpack.c.bf16 %v396, %v392
      %v463 = vpack.c.bf16 %v398, %v394
      %v464 = vpack.c.bf16 %v448, %v445
      %v465 = vpack.c.bf16 %v353, %v349
      %v466 = vpack.c.bf16 %v355, %v351
      %v467 = vpack.c.bf16 %v406, %v402
      %v468 = vpack.c.bf16 %v408, %v404
      %v469 = vpack.c.bf16 %v456, %v453
      %v470 = vxor.u32 %v460, 2147516416
      %v471 = vxor.u32 %v461, 2147516416
      %v472 = vxor.u32 %v462, 2147516416
      %v473 = vxor.u32 %v463, 2147516416
      %v474 = vxor.u32 %v464, 2147516416
      %v475 = vxor.u32 %v465, 2147516416
      %v476 = vxor.u32 %v466, 2147516416
      %v477 = vxor.u32 %v467, 2147516416
      %v478 = vxor.u32 %v468, 2147516416
      %v479 = vxor.u32 %v469, 2147516416
      %v481 = vmul.bf16 %v470, 1069105081
      %v482 = vpow.bf16.pop %v481
      %v484 = vmul.bf16 %v471, 1069105081
      %v485 = vpow.bf16.pop %v484
      %v487 = vmul.bf16 %v472, 1069105081
      %v488 = vpow.bf16.pop %v487
      %v490 = vmul.bf16 %v473, 1069105081
      %v491 = vpow.bf16.pop %v490
      %v493 = vmul.bf16 %v474, 1069105081
      %v494 = vpow.bf16.pop %v493
      %v496 = vmul.bf16 %v475, 1069105081
      %v497 = vpow.bf16.pop %v496
      %v499 = vmul.bf16 %v476, 1069105081
      %v500 = vpow.bf16.pop %v499
      %v502 = vmul.bf16 %v477, 1069105081
      %v503 = vpow.bf16.pop %v502
      %v505 = vmul.bf16 %v478, 1069105081
      %v506 = vpow.bf16.pop %v505
      %v508 = vmul.bf16 %v479, 1069105081
      %v509 = vpow.bf16.pop %v508
      %v510 = vadd.bf16 %v482, 1065369472
      %v511 = vadd.bf16 %v485, 1065369472
      %v512 = vadd.bf16 %v488, 1065369472
      %v513 = vadd.bf16 %v491, 1065369472
      %v514 = vadd.bf16 %v494, 1065369472
      %v515 = vadd.bf16 %v497, 1065369472
      %v516 = vadd.bf16 %v500, 1065369472
      %v517 = vadd.bf16 %v503, 1065369472
      %v518 = vadd.bf16 %v506, 1065369472
      %v519 = vadd.bf16 %v509, 1065369472
      %v520 = vrcp.bf16.pop %v510
      %v521 = vmul.bf16 1065369472, %v520
      %v522 = vrcp.bf16.pop %v511
      %v523 = vmul.bf16 1065369472, %v522
      %v524 = vrcp.bf16.pop %v512
      %v525 = vmul.bf16 1065369472, %v524
      %v526 = vrcp.bf16.pop %v513
      %v527 = vmul.bf16 1065369472, %v526
      %v528 = vrcp.bf16.pop %v514
      %v529 = vmul.bf16 1065369472, %v528
      %v530 = vrcp.bf16.pop %v515
      %v531 = vmul.bf16 1065369472, %v530
      %v532 = vrcp.bf16.pop %v516
      %v533 = vmul.bf16 1065369472, %v532
      %v534 = vrcp.bf16.pop %v517
      %v535 = vmul.bf16 1065369472, %v534
      %v536 = vrcp.bf16.pop %v518
      %v537 = vmul.bf16 1065369472, %v536
      %v538 = vrcp.bf16.pop %v519
      %v539 = vmul.bf16 1065369472, %v538
      %v540 = vmul.bf16 %v460, %v521
      %v541 = vmul.bf16 %v461, %v523
      %v542 = vmul.bf16 %v462, %v525
      %v543 = vmul.bf16 %v463, %v527
      %v544 = vmul.bf16 %v464, %v529
      %v545 = vmul.bf16 %v465, %v531
      %v546 = vmul.bf16 %v466, %v533
      %v547 = vmul.bf16 %v467, %v535
      %v548 = vmul.bf16 %v468, %v537
      %v549 = vmul.bf16 %v469, %v539
      %v550 = vmax.bf16 %v540, 897987974
      %v551 = vmax.bf16 %v541, 897987974
      %v552 = vmax.bf16 %v542, 897987974
      %v553 = vmax.bf16 %v543, 897987974
      %v554 = vmax.bf16 %v544, 897987974
      %v555 = vmax.bf16 %v545, 897987974
      %v556 = vmax.bf16 %v546, 897987974
      %v557 = vmax.bf16 %v547, 897987974
      %v558 = vmax.bf16 %v548, 897987974
      %v559 = vmax.bf16 %v549, 897987974
      %p561 = scmp.ne.f32.partialorder %s459, %s459
      %s562 = sshrl.u32 %s459, 16
      %s563 = sand.u32 %s562, 1
      %s564 = sadd.s32 32767, %s563
      %s565 = sadd.s32 %s459, %s564
      %s566 = sand.u32 %s565, 4294901760
      %s567 = scalar_select %p561, 2143289344, %s566
      %s569 = sshrl.u32 %s567, 16
      %v570 = vlog2.bf16.pop %v550
      %v572 = vmul.bf16 %v570, 1060192049
      %v573 = vlog2.bf16.pop %v551
      %v575 = vmul.bf16 %v573, 1060192049
      %v576 = vlog2.bf16.pop %v552
      %v578 = vmul.bf16 %v576, 1060192049
      %v579 = vlog2.bf16.pop %v553
      %v581 = vmul.bf16 %v579, 1060192049
      %v582 = vlog2.bf16.pop %v554
      %v584 = vmul.bf16 %v582, 1060192049
      %v585 = vlog2.bf16.pop %v555
      %v587 = vmul.bf16 %v585, 1060192049
      %v588 = vlog2.bf16.pop %v556
      %v590 = vmul.bf16 %v588, 1060192049
      %v591 = vlog2.bf16.pop %v557
      %v593 = vmul.bf16 %v591, 1060192049
      %v594 = vlog2.bf16.pop %v558
      %v596 = vmul.bf16 %v594, 1060192049
      %v597 = vlog2.bf16.pop %v559
      %v599 = vmul.bf16 %v597, 1060192049
      %s600 = sshll.u32 %s569, 16
      %s601 = sor.u32 %s569, %s600
      %v602 = vstv %s601
      %v604 = vmul.bf16 %v602, %v572
      %v605 = vmul.bf16 %v602, %v575
      %v606 = vmul.bf16 %v602, %v578
      %v607 = vmul.bf16 %v602, %v581
      %v608 = vmul.bf16 %v602, %v584
      %v609 = vmul.bf16 %v602, %v587
      %v610 = vmul.bf16 %v602, %v590
      %v611 = vmul.bf16 %v602, %v593
      %v612 = vmul.bf16 %v602, %v596
      %v613 = vmul.bf16 %v602, %v599
      %v615 = vmul.bf16 %v604, 1069105081
      %v616 = vpow.bf16.pop %v615
      %v618 = vmul.bf16 %v605, 1069105081
      %v619 = vpow.bf16.pop %v618
      %v621 = vmul.bf16 %v606, 1069105081
      %v622 = vpow.bf16.pop %v621
      %v624 = vmul.bf16 %v607, 1069105081
      %v625 = vpow.bf16.pop %v624
      %v627 = vmul.bf16 %v608, 1069105081
      %v628 = vpow.bf16.pop %v627
      %v630 = vmul.bf16 %v609, 1069105081
      %v631 = vpow.bf16.pop %v630
      %v633 = vmul.bf16 %v610, 1069105081
      %v634 = vpow.bf16.pop %v633
      %v636 = vmul.bf16 %v611, 1069105081
      %v637 = vpow.bf16.pop %v636
      %v639 = vmul.bf16 %v612, 1069105081
      %v640 = vpow.bf16.pop %v639
      %v642 = vmul.bf16 %v613, 1069105081
      %v643 = vpow.bf16.pop %v642
      %v644 = vunpack.c.l.bf16 %v616
      %v645 = vunpack.c.l.bf16 %v619
      %v646 = vunpack.c.l.bf16 %v622
      %v647 = vunpack.c.l.bf16 %v625
      %v648 = vunpack.c.l.bf16 %v628
      %v649 = vunpack.c.h.bf16 %v616
      %v650 = vunpack.c.h.bf16 %v619
      %v651 = vunpack.c.h.bf16 %v622
      %v652 = vunpack.c.h.bf16 %v625
      %v653 = vunpack.c.h.bf16 %v628
      %v654 = vunpack.c.l.bf16 %v631
      %v655 = vunpack.c.l.bf16 %v634
      %v656 = vunpack.c.l.bf16 %v637
      %v657 = vunpack.c.l.bf16 %v640
      %v658 = vunpack.c.l.bf16 %v643
      %v659 = vunpack.c.h.bf16 %v631
      %v660 = vunpack.c.h.bf16 %v634
      %v661 = vunpack.c.h.bf16 %v637
      %v662 = vunpack.c.h.bf16 %v640
      %v663 = vunpack.c.h.bf16 %v643
      %p664 = scmp.lt.s32.totalorder %s21, 0
      // Predicated region
      $region37: #{birdclef_forward.2} parent=31 // pred_check
        %p665 = pneg %p664
      $region38: #{birdclef_forward.2} parent=31 // pred_check_branch
        %667 = sbr.rel (%p665) target = $region40
      $region39: #{birdclef_forward.2} parent=31 // pred_region
        %v668 = vld [vmem:[#allocation2] sm:$0xff]
        %v669 = vld [vmem:[#allocation2 + $0x8] sm:$0xff]
        %v670 = vld [vmem:[#allocation2 + $0x10] sm:$0xff]
        %v671 = vld [vmem:[#allocation2 + $0x18] sm:$0xff]
        %v672 = vadd.f32 %v644, %v645
        %v673 = vadd.f32 %v672, %v646
        %v674 = vadd.f32 %v673, %v647
        %v675 = vadd.f32 %v674, %v648
        %676 = vadd.xlane.f32.xlu0 %v675
        %v677 = vpop.xlane.xlu0 %676
        %v678 = vadd.f32 %v649, %v650
        %v679 = vadd.f32 %v678, %v651
        %v680 = vadd.f32 %v679, %v652
        %v681 = vadd.f32 %v680, %v653
        %682 = vadd.xlane.f32.xlu0 %v681
        %v683 = vpop.xlane.xlu0 %682
        %v684 = vadd.f32 %v654, %v655
        %v685 = vadd.f32 %v684, %v656
        %v686 = vadd.f32 %v685, %v657
        %v687 = vadd.f32 %v686, %v658
        %688 = vadd.xlane.f32.xlu0 %v687
        %v689 = vpop.xlane.xlu0 %688
        %v690 = vadd.f32 %v659, %v660
        %v691 = vadd.f32 %v690, %v661
        %v692 = vadd.f32 %v691, %v662
        %v693 = vadd.f32 %v692, %v663
        %694 = vadd.xlane.f32.xlu0 %v693
        %v695 = vpop.xlane.xlu0 %694
        %v696 = vadd.f32 %v668, %v677
        %v697 = vadd.f32 %v669, %v683
        %v698 = vadd.f32 %v670, %v689
        %v699 = vadd.f32 %v671, %v695
        %vm700 = vcmask 7168
        %701 = vst.msk [vmem:[#allocation2] sm:$0xff] %vm700, %v696
        %702 = vst.msk [vmem:[#allocation2 + $0x8] sm:$0xff] %vm700, %v697
        %703 = vst.msk [vmem:[#allocation2 + $0x10] sm:$0xff] %vm700, %v698
        %704 = vst.msk [vmem:[#allocation2 + $0x18] sm:$0xff] %vm700, %v699
      $region40: #{birdclef_forward.2} parent=31 // pred_fallthru
        _
      // Predicated region
      $region41: #{birdclef_forward.2} parent=31 // pred_check
        %p705 = pneg %p204
      $region42: #{birdclef_forward.2} parent=31 // pred_check_branch
        %707 = sbr.rel (%p705) target = $region44
      $region43: #{birdclef_forward.2} parent=31 // pred_region
        %v708 = vlaneseq
        %v709 = vand.u32 %v708, 127
        %v710 = vadd.s32 %v709, 128
        %v711 = vadd.s32 %v709, 256
        %v712 = vadd.s32 %v709, 384
        %v713 = vadd.s32 %v709, 512
        %s714 = smul.u32 %s21, 640
        %s715 = ssub.s32 576, %s714
        %v716 = vstv %s715
        %vm717 = vcmp.lt.s32.totalorder %v709, %v716
        %vm718 = vcmp.lt.s32.totalorder %v710, %v716
        %vm719 = vcmp.lt.s32.totalorder %v711, %v716
        %vm720 = vcmp.lt.s32.totalorder %v712, %v716
        %vm721 = vcmp.lt.s32.totalorder %v713, %v716
        %v722 = vsel %vm717, %v644, 0.0
        %v723 = vsel %vm718, %v645, 0.0
        %v724 = vsel %vm719, %v646, 0.0
        %v725 = vsel %vm720, %v647, 0.0
        %v726 = vsel %vm721, %v648, 0.0
        %v727 = vsel %vm717, %v649, 0.0
        %v728 = vsel %vm718, %v650, 0.0
        %v729 = vsel %vm719, %v651, 0.0
        %v730 = vsel %vm720, %v652, 0.0
        %v731 = vsel %vm721, %v653, 0.0
        %v732 = vsel %vm717, %v654, 0.0
        %v733 = vsel %vm718, %v655, 0.0
        %v734 = vsel %vm719, %v656, 0.0
        %v735 = vsel %vm720, %v657, 0.0
        %v736 = vsel %vm721, %v658, 0.0
        %v737 = vsel %vm717, %v659, 0.0
        %v738 = vsel %vm718, %v660, 0.0
        %v739 = vsel %vm719, %v661, 0.0
        %v740 = vsel %vm720, %v662, 0.0
        %v741 = vsel %vm721, %v663, 0.0
        %v742 = vld [vmem:[#allocation2] sm:$0xff]
        %v743 = vld [vmem:[#allocation2 + $0x8] sm:$0xff]
        %v744 = vld [vmem:[#allocation2 + $0x10] sm:$0xff]
        %v745 = vld [vmem:[#allocation2 + $0x18] sm:$0xff]
        %v746 = vadd.f32 %v722, %v723
        %v747 = vadd.f32 %v746, %v724
        %v748 = vadd.f32 %v747, %v725
        %v749 = vadd.f32 %v748, %v726
        %750 = vadd.xlane.f32.xlu0 %v749
        %v751 = vpop.xlane.xlu0 %750
        %v752 = vadd.f32 %v727, %v728
        %v753 = vadd.f32 %v752, %v729
        %v754 = vadd.f32 %v753, %v730
        %v755 = vadd.f32 %v754, %v731
        %756 = vadd.xlane.f32.xlu0 %v755
        %v757 = vpop.xlane.xlu0 %756
        %v758 = vadd.f32 %v732, %v733
        %v759 = vadd.f32 %v758, %v734
        %v760 = vadd.f32 %v759, %v735
        %v761 = vadd.f32 %v760, %v736
        %762 = vadd.xlane.f32.xlu0 %v761
        %v763 = vpop.xlane.xlu0 %762
        %v764 = vadd.f32 %v737, %v738
        %v765 = vadd.f32 %v764, %v739
        %v766 = vadd.f32 %v765, %v740
        %v767 = vadd.f32 %v766, %v741
        %768 = vadd.xlane.f32.xlu0 %v767
        %v769 = vpop.xlane.xlu0 %768
        %v770 = vadd.f32 %v742, %v751
        %v771 = vadd.f32 %v743, %v757
        %v772 = vadd.f32 %v744, %v763
        %v773 = vadd.f32 %v745, %v769
        %vm774 = vcmask 7168
        %775 = vst.msk [vmem:[#allocation2] sm:$0xff] %vm774, %v770
        %776 = vst.msk [vmem:[#allocation2 + $0x8] sm:$0xff] %vm774, %v771
        %777 = vst.msk [vmem:[#allocation2 + $0x10] sm:$0xff] %vm774, %v772
        %778 = vst.msk [vmem:[#allocation2 + $0x18] sm:$0xff] %vm774, %v773
        %v779 = vld [vmem:[#allocation2] sm:$0xff]
        %v780 = vld [vmem:[#allocation2 + $0x8] sm:$0xff]
        %v781 = vld [vmem:[#allocation2 + $0x10] sm:$0xff]
        %v782 = vld [vmem:[#allocation2 + $0x18] sm:$0xff]
        %783 = vst.msk [vmem:[%s200] sm:$0xff] %vm774, %v779
        %784 = vst.msk [vmem:[%s200 + $0x8] sm:$0xff] %vm774, %v780
        %785 = vst.msk [vmem:[%s200 + $0x10] sm:$0xff] %vm774, %v781
        %786 = vst.msk [vmem:[%s200 + $0x18] sm:$0xff] %vm774, %v782
      $region44: #{birdclef_forward.2} parent=31 // pred_fallthru
        _
      %p787 = scmp.lt.s32.totalorder %s20, 1
      %s788 = scalar_select %p787, %s20, 1
      %s789 = smul.addr %s788, 4
      %s790 = smul.addr %s789, 8
      %s791 = scalar_lea.vmem %s4, %s790
      // Predicated region
      $region45: #{birdclef_forward.2} parent=31 // pred_check
        %p792 = pneg %p116
      $region46: #{birdclef_forward.2} parent=31 // pred_check_branch
        %794 = sbr.rel (%p792) target = $region48
      $region47: #{birdclef_forward.2} parent=31 // pred_region
        _
      $region48: #{birdclef_forward.2} parent=31 // pred_fallthru
        _
    $region32: #{birdclef_forward.2} parent=5 // pred_fallthru
      _
    %p795 = scmp.le.s32.totalorder 2, %s11
    // Predicated region
    $region49: #{birdclef_forward.2} parent=5 // pred_check
      %p796 = pneg %p795
    $region50: #{birdclef_forward.2} parent=5 // pred_check_branch
      %798 = sbr.rel (%p796) target = $region52
    $region51: #{birdclef_forward.2} parent=5 // pred_region
      %s799 = ssub.s32 %s11, 2
      // Predicated region
      $region53: #{birdclef_forward.2} parent=51 // pred_check
        %p800 = pneg %p122
      $region54: #{birdclef_forward.2} parent=51 // pred_check_branch
        %802 = sbr.rel (%p800) target = $region56
      $region55: #{birdclef_forward.2} parent=51 // pred_region
        %p803 = scmp.lt.s32.totalorder %s22, 1
        %s804 = scalar_select %p803, %s22, 1
        %s805 = smul.addr %s804, 4
        %s806 = smul.addr %s805, 8
        %s807 = scalar_lea.vmem %s4, %s806
      $region56: #{birdclef_forward.2} parent=51 // pred_fallthru
        _
    $region52: #{birdclef_forward.2} parent=5 // pred_fallthru
      _
  $region6: #{birdclef_forward.2} parent=0 // loop_footer
    %s15 = sadd.s32 1, %s11
  $region7: #{birdclef_forward.2} parent=0 // loop_footer_branch
    %10 = sbr.rel target = $region3
  $region8: #{birdclef_forward.2} parent=0 // loop_exit
    _

</llo_original>
